<compile_context>
chip_gen: v7x
topology: tpu7x:2x2x1
jax: 0.10.0
libtpu: 0.0.40
codegen_flags: <defaults>
</compile_context>

<pallas_src>
import functools

import jax
import jax.numpy as jnp
from jax.experimental import pallas as pl
from jax.experimental.pallas import tpu as pltpu


# ----------------------------------------------------------------------------- helpers
def _round_up(x, m):
    return (x + m - 1) // m * m


def _cpad(c):
    """Channel count padded to a multiple of 128 (lane width)."""
    return _round_up(c, 128)


def _apply_act(y, act):
    if act == "relu":
        return jnp.maximum(y, 0.0)
    if act == "hardswish":
        return y * jnp.clip(y + 3.0, 0.0, 6.0) * (1.0 / 6.0)
    if act == "hardsigmoid":
        return jnp.clip(y + 3.0, 0.0, 6.0) * (1.0 / 6.0)
    return y


_PARALLEL1 = pltpu.CompilerParams(dimension_semantics=("parallel",))


# ----------------------------------------------------------------------------- stem (3,1) conv: VPU 3-tap
def _stem_kernel(c_ref, w_ref, b_ref, o_ref, *, act):
    c = c_ref[0]                                               # (M, 3) f32
    y = (c[:, 0:1] * w_ref[0:1, :]
         + c[:, 1:2] * w_ref[1:2, :]
         + c[:, 2:3] * w_ref[2:3, :]) + b_ref[...]
    o_ref[...] = _apply_act(y, act)[None]


def stem_conv(cols, w, b, act="hardswish"):
    """cols:(B, M, 3)  w:(3, Cout_p) f32 (BN folded)  b:(1, Cout_p)."""
    B, M, K = cols.shape
    Cout = w.shape[1]
    return pl.pallas_call(
        functools.partial(_stem_kernel, act=act),
        out_shape=jax.ShapeDtypeStruct((B, M, Cout), jnp.float32),
        grid=(B,),
        in_specs=[
            pl.BlockSpec((1, M, K), lambda n: (n, 0, 0)),
            pl.BlockSpec((K, Cout), lambda n: (0, 0)),
            pl.BlockSpec((1, Cout), lambda n: (0, 0)),
        ],
        out_specs=pl.BlockSpec((1, M, Cout), lambda n: (n, 0, 0)),
        compiler_params=_PARALLEL1,
    )(cols, w, b)


# ----------------------------------------------------------------------------- 1x1 conv (+BN bias +act), fused SE scale / residual
def _conv1x1_kernel(*refs, act, has_scale, has_residual):
    x_ref, w_ref, b_ref = refs[0], refs[1], refs[2]
    i = 3
    s_ref = r_ref = None
    if has_scale:
        s_ref = refs[i]
        i += 1
    if has_residual:
        r_ref = refs[i]
        i += 1
    o_ref = refs[i]

    x = x_ref[0]                                               # (HW, Cin) f32
    if has_scale:
        x = x * s_ref[0]                                       # fused SE channel rescale
    y = jnp.dot(x.astype(jnp.bfloat16), w_ref[...],
                preferred_element_type=jnp.float32) + b_ref[...]
    y = _apply_act(y, act)
    if has_residual:
        y = y + r_ref[0]                                       # fused residual add
    o_ref[...] = y[None]


def conv1x1_bn_act(x4, w, b, act=None, scale=None, residual=None):
    """x4:(N,H,W,Cin_p)  w:(Cin_p,Cout_p) bf16  b:(1,Cout_p) f32
       scale:(N,1,Cin_p) f32 or None  residual:(N,H,W,Cout_p) f32 or None."""
    N, H, W, Cin = x4.shape
    Cout = w.shape[1]
    HW = H * W
    inputs = [x4.reshape(N, HW, Cin), w, b]
    specs = [
        pl.BlockSpec((1, HW, Cin), lambda n: (n, 0, 0)),
        pl.BlockSpec((Cin, Cout), lambda n: (0, 0)),
        pl.BlockSpec((1, Cout), lambda n: (0, 0)),
    ]
    if scale is not None:
        inputs.append(scale)
        specs.append(pl.BlockSpec((1, 1, Cin), lambda n: (n, 0, 0)))
    if residual is not None:
        inputs.append(residual.reshape(N, HW, Cout))
        specs.append(pl.BlockSpec((1, HW, Cout), lambda n: (n, 0, 0)))
    out = pl.pallas_call(
        functools.partial(_conv1x1_kernel, act=act,
                          has_scale=scale is not None,
                          has_residual=residual is not None),
        out_shape=jax.ShapeDtypeStruct((N, HW, Cout), jnp.float32),
        grid=(N,),
        in_specs=specs,
        out_specs=pl.BlockSpec((1, HW, Cout), lambda n: (n, 0, 0)),
        compiler_params=_PARALLEL1,
    )(*inputs)
    return out.reshape(N, H, W, Cout)


# ----------------------------------------------------------------------------- depthwise KxK conv (+BN bias +act), stride-aware
def _dw_kernel(x_ref, w_ref, b_ref, o_ref, *, ksize, stride, Ho, Wo, Hc, act):
    Cp = o_ref.shape[3]
    acc = jnp.zeros((1, Ho, Wo, Cp), jnp.float32)
    for ki in range(ksize):
        for kj in range(ksize):
            ph = (ki % stride) * stride + (kj % stride)        # phase plane index
            hoff = ph * Hc + ki // stride
            woff = kj // stride
            acc = acc + (x_ref[:, hoff:hoff + Ho, woff:woff + Wo, :]
                         * w_ref[ki, kj:kj + 1, :])
    o_ref[...] = _apply_act(acc + b_ref[...], act)


def depthwise_conv_bn_act(x4, w, b, ksize, stride, act):
    """Depthwise conv with folded BN + activation; only strided outputs are computed.
    For stride>1 the padded input is split into stride*stride interleaved phase planes (stacked
    along H) in glue, so every kernel tap is a contiguous static slice."""
    N, H, W, Cp = x4.shape
    pad = (ksize - 1) // 2
    Ho = (H + 2 * pad - ksize) // stride + 1
    Wo = (W + 2 * pad - ksize) // stride + 1
    xp = jnp.pad(x4, ((0, 0), (pad, pad), (pad, pad), (0, 0)))
    if stride == 1:
        Hc, Wc = H + 2 * pad, W + 2 * pad
        x_st = xp
    else:
        Hc = Ho + (ksize - 1) // stride
        Wc = Wo + (ksize - 1) // stride
        planes = []
        for pi in range(stride):
            for pj in range(stride):
                ph = xp[:, pi::stride, pj::stride, :][:, :Hc, :Wc, :]
                ph = jnp.pad(ph, ((0, 0), (0, Hc - ph.shape[1]),
                                  (0, Wc - ph.shape[2]), (0, 0)))
                planes.append(ph)
        x_st = jnp.concatenate(planes, axis=1)                 # (N, s*s*Hc, Wc, Cp)
    Hst = x_st.shape[1]
    return pl.pallas_call(
        functools.partial(_dw_kernel, ksize=ksize, stride=stride,
                          Ho=Ho, Wo=Wo, Hc=Hc, act=act),
        out_shape=jax.ShapeDtypeStruct((N, Ho, Wo, Cp), jnp.float32),
        grid=(N,),
        in_specs=[
            pl.BlockSpec((1, Hst, Wc, Cp), lambda n: (n, 0, 0, 0)),
            pl.BlockSpec((ksize, ksize, Cp), lambda n: (0, 0, 0)),
            pl.BlockSpec((1, Cp), lambda n: (0, 0)),
        ],
        out_specs=pl.BlockSpec((1, Ho, Wo, Cp), lambda n: (n, 0, 0, 0)),
        compiler_params=_PARALLEL1,
    )(x_st, w, b)


# ----------------------------------------------------------------------------- squeeze-excite (pool + fc1 + fc2 in one kernel)
def _se_kernel(x_ref, w1_ref, b1_ref, w2_ref, b2_ref, o_ref):
    pooled = jnp.mean(x_ref[0], axis=0, keepdims=True)         # (1, Cexp) exact avg pool
    h = jnp.dot(pooled.astype(jnp.bfloat16), w1_ref[...],
                preferred_element_type=jnp.float32) + b1_ref[...]
    h = jnp.maximum(h, 0.0)
    s = jnp.dot(h.astype(jnp.bfloat16), w2_ref[...],
                preferred_element_type=jnp.float32) + b2_ref[...]
    o_ref[...] = _apply_act(s, "hardsigmoid")[None]


def se_scale(x4, w1, b1, w2, b2):
    """Returns the per-(batch, channel) SE scale (N, 1, Cexp_p); the rescale itself is fused into
    the following project conv."""
    N, H, W, Cp = x4.shape
    HW = H * W
    Cs = w1.shape[1]
    return pl.pallas_call(
        _se_kernel,
        out_shape=jax.ShapeDtypeStruct((N, 1, Cp), jnp.float32),
        grid=(N,),
        in_specs=[
            pl.BlockSpec((1, HW, Cp), lambda n: (n, 0, 0)),
            pl.BlockSpec((Cp, Cs), lambda n: (0, 0)),
            pl.BlockSpec((1, Cs), lambda n: (0, 0)),
            pl.BlockSpec((Cs, Cp), lambda n: (0, 0)),
            pl.BlockSpec((1, Cp), lambda n: (0, 0)),
        ],
        out_specs=pl.BlockSpec((1, 1, Cp), lambda n: (n, 0, 0)),
        compiler_params=_PARALLEL1,
    )(x4.reshape(N, HW, Cp), w1, b1, w2, b2)


# ----------------------------------------------------------------------------- fused BiLSTM (len-1, zero state) + fc1 + fc2
def _head_kernel(x_ref, wg_ref, bg_ref, w1_ref, b1_ref, w2_ref, b2_ref, o_ref, *, hidden):
    gates = jnp.dot(x_ref[...].astype(jnp.bfloat16), wg_ref[...],
                    preferred_element_type=jnp.float32) + bg_ref[...]   # (B, 8H)

    def cell(g):
        # PyTorch gate order i, f, g, o.  Length-1 sequence from zero state => c0 = 0, so the
        # forget gate drops out: c1 = i*g, h1 = o*tanh(c1).
        i = jax.nn.sigmoid(g[:, 0 * hidden:1 * hidden])
        gg = jnp.tanh(g[:, 2 * hidden:3 * hidden])
        o = jax.nn.sigmoid(g[:, 3 * hidden:4 * hidden])
        return o * jnp.tanh(i * gg)

    seq = jnp.concatenate([cell(gates[:, :4 * hidden]),
                           cell(gates[:, 4 * hidden:])], axis=-1)       # (B, 2H)
    z = jnp.dot(seq.astype(jnp.bfloat16), w1_ref[...],
                preferred_element_type=jnp.float32) + b1_ref[...]       # fc1
    z = jnp.dot(z.astype(jnp.bfloat16), w2_ref[...],
                preferred_element_type=jnp.float32) + b2_ref[...]       # fc2
    o_ref[...] = z


def lstm_fc_head(feat, p, hidden):
    B, D = feat.shape
    Bp = _round_up(B, 8)
    featp = jnp.pad(feat, ((0, Bp - B), (0, 0)))
    out = pl.pallas_call(
        functools.partial(_head_kernel, hidden=hidden),
        out_shape=jax.ShapeDtypeStruct((Bp, p["fc2_w"].shape[1]), jnp.float32),
    )(featp, p["lstm_wg"], p["lstm_bg"], p["fc1_w"], p["fc1_b"], p["fc2_w"], p["fc2_b"])
    return out[:B]


# ----------------------------------------------------------------------------- parameters
# MobileNetV3-Small inverted-residual config: (kernel, expand, out, use_se, activation, stride)
CFG = [
    (3, 16, 16, True, "relu", 2),
    (3, 72, 24, False, "relu", 2),
    (3, 88, 24, False, "relu", 1),
    (5, 96, 40, True, "hardswish", 2),
    (5, 240, 40, True, "hardswish", 1),
    (5, 240, 40, True, "hardswish", 1),
    (5, 120, 48, True, "hardswish", 1),
    (5, 144, 48, True, "hardswish", 1),
    (5, 288, 96, True, "hardswish", 2),
    (5, 576, 96, True, "hardswish", 1),
    (5, 576, 96, True, "hardswish", 1),
]


def _make_divisible(v, divisor=8):
    new_v = max(divisor, int(v + divisor / 2) // divisor * divisor)
    if new_v < 0.9 * v:
        new_v += divisor
    return new_v


def _winit(key, shape, fan_in):
    return jax.random.normal(key, shape, dtype=jnp.float32) * jnp.sqrt(2.0 / fan_in)


def _fold_bn(key, w, cout, axis, eps=1e-3):
    """Fold eval-mode BatchNorm into the preceding conv weight; returns (w_folded, bias)."""
    k1, k2, k3, k4 = jax.random.split(key, 4)
    gamma = jax.random.uniform(k1, (cout,), minval=0.8, maxval=1.2)
    beta = 0.05 * jax.random.normal(k2, (cout,))
    mean = 0.05 * jax.random.normal(k3, (cout,))
    var = jax.random.uniform(k4, (cout,), minval=0.9, maxval=1.1)
    scale = gamma / jnp.sqrt(var + eps)
    shape = [1] * w.ndim
    shape[axis] = cout
    return w * scale.reshape(shape), (beta - mean * scale).astype(jnp.float32)


def init_params(key, hidden=256, output_size=2):
    keys = iter(jax.random.split(key, 256))
    p = {"output_size": output_size}

    # stem: Conv2d(1, 16, kernel=(3,1), stride=(2,1), padding=(1,0), bias=False) + BN + Hardswish
    w = _winit(next(keys), (3, 16), 3)
    w, b = _fold_bn(next(keys), w, 16, axis=1)
    p["stem_w"] = jnp.pad(w, ((0, 0), (0, _cpad(16) - 16)))                      # f32 (VPU path)
    p["stem_b"] = jnp.pad(b, (0, _cpad(16) - 16)).reshape(1, -1)

    cin = 16
    blocks = []
    for (k, exp, cout, use_se, act, stride) in CFG:
        cin_p, exp_p, cout_p = _cpad(cin), _cpad(exp), _cpad(cout)
        blk = {"k": k, "act": act, "stride": stride, "cin": cin, "cout": cout, "use_se": use_se}
        if exp != cin:  # expand 1x1 conv + BN + act
            w = _winit(next(keys), (cin, exp), cin)
            w, b = _fold_bn(next(keys), w, exp, axis=1)
            blk["exp_w"] = jnp.pad(w, ((0, cin_p - cin), (0, exp_p - exp))).astype(jnp.bfloat16)
            blk["exp_b"] = jnp.pad(b, (0, exp_p - exp)).reshape(1, -1)
        w = _winit(next(keys), (k, k, exp), k * k)  # depthwise + BN + act
        w, b = _fold_bn(next(keys), w, exp, axis=2)
        blk["dw_w"] = jnp.pad(w, ((0, 0), (0, 0), (0, exp_p - exp)))             # f32 (VPU path)
        blk["dw_b"] = jnp.pad(b, (0, exp_p - exp)).reshape(1, -1)
        if use_se:
            cs = _make_divisible(exp // 4, 8)
            cs_p = _cpad(cs)
            w1 = _winit(next(keys), (exp, cs), exp)
            w2 = _winit(next(keys), (cs, exp), cs)
            blk["se_w1"] = jnp.pad(w1, ((0, exp_p - exp), (0, cs_p - cs))).astype(jnp.bfloat16)
            blk["se_b1"] = jnp.zeros((1, cs_p), jnp.float32)
            blk["se_w2"] = jnp.pad(w2, ((0, cs_p - cs), (0, exp_p - exp))).astype(jnp.bfloat16)
            blk["se_b2"] = jnp.zeros((1, exp_p), jnp.float32)
        w = _winit(next(keys), (exp, cout), exp)    # project 1x1 conv + BN (no act)
        w, b = _fold_bn(next(keys), w, cout, axis=1)
        blk["proj_w"] = jnp.pad(w, ((0, exp_p - exp), (0, cout_p - cout))).astype(jnp.bfloat16)
        blk["proj_b"] = jnp.pad(b, (0, cout_p - cout)).reshape(1, -1)
        blocks.append(blk)
        cin = cout
    p["blocks"] = blocks

    # head 1x1 conv 96 -> 576 + BN + Hardswish
    w = _winit(next(keys), (96, 576), 96)
    w, b = _fold_bn(next(keys), w, 576, axis=1)
    p["head_w"] = jnp.pad(w, ((0, _cpad(96) - 96), (0, _cpad(576) - 576))).astype(jnp.bfloat16)
    p["head_b"] = jnp.pad(b, (0, _cpad(576) - 576)).reshape(1, -1)

    # BiLSTM: input 576, hidden 256, 1 layer, bidirectional.  Sequence length is 1 with zero
    # initial state, so W_hh never contributes; bias = b_ih + b_hh.  fwd/bwd gate matmuls fused.
    D = 576
    Dp = _cpad(D)
    wf = 0.05 * jax.random.normal(next(keys), (D, 4 * hidden), dtype=jnp.float32)
    wb = 0.05 * jax.random.normal(next(keys), (D, 4 * hidden), dtype=jnp.float32)
    bf = 0.05 * jax.random.normal(next(keys), (4 * hidden,), dtype=jnp.float32)
    bb = 0.05 * jax.random.normal(next(keys), (4 * hidden,), dtype=jnp.float32)
    wg = jnp.concatenate([wf, wb], axis=1)                                       # (576, 8H)
    p["lstm_wg"] = jnp.pad(wg, ((0, Dp - D), (0, 0))).astype(jnp.bfloat16)
    p["lstm_bg"] = jnp.concatenate([bf, bb]).reshape(1, -1)

    p["fc1_w"] = _winit(next(keys), (2 * hidden, hidden), 2 * hidden).astype(jnp.bfloat16)
    p["fc1_b"] = jnp.zeros((1, hidden), jnp.float32)
    out_p = _cpad(output_size)
    w = _winit(next(keys), (hidden, output_size), hidden)
    p["fc2_w"] = jnp.pad(w, ((0, 0), (0, out_p - output_size))).astype(jnp.bfloat16)
    p["fc2_b"] = jnp.zeros((1, out_p), jnp.float32)
    return p


# ----------------------------------------------------------------------------- forward
def forward(x, p, hidden=256):
    # x: (B, H, W).  Module: x.unsqueeze(1) -> NCHW (B,1,H,W); here NHWC with C padded to 128.
    B, H, W = x.shape
    x = x.astype(jnp.float32)

    # stem conv (3,1) stride (2,1) pad (1,0): strided tap gather (glue) + Pallas 3-tap VPU kernel
    xp = jnp.pad(x, ((0, 0), (1, 1), (0, 0)))
    Ho = (H + 2 - 3) // 2 + 1
    cols = jnp.stack([xp[:, ki:ki + 2 * (Ho - 1) + 1:2, :] for ki in range(3)], axis=-1)
    y = stem_conv(cols.reshape(B, Ho * W, 3), p["stem_w"], p["stem_b"], act="hardswish")
    y = y.reshape(B, Ho, W, p["stem_w"].shape[1])

    for blk in p["blocks"]:
        y_in = y
        act = blk["act"]
        h = y
        if "exp_w" in blk:
            h = conv1x1_bn_act(h, blk["exp_w"], blk["exp_b"], act=act)
        h = depthwise_conv_bn_act(h, blk["dw_w"], blk["dw_b"], blk["k"], blk["stride"], act)
        scale = None
        if blk["use_se"]:
            scale = se_scale(h, blk["se_w1"], blk["se_b1"], blk["se_w2"], blk["se_b2"])
        res = y_in if (blk["stride"] == 1 and blk["cin"] == blk["cout"]) else None
        # project conv with fused SE rescale + fused residual add
        y = conv1x1_bn_act(h, blk["proj_w"], blk["proj_b"], act=None, scale=scale, residual=res)

    y = conv1x1_bn_act(y, p["head_w"], p["head_b"], act="hardswish")     # (B, h, w, 640)
    feat = jnp.mean(y, axis=(1, 2))                                      # AdaptiveAvgPool2d(1)

    # x.view(B,-1).unsqueeze(-1).permute(0,2,1): length-1 sequence of 576 features.
    # Fused BiLSTM(fwd+bwd, zero state) + fc1 + fc2 kernel.
    z = lstm_fc_head(feat, p, hidden)[:, :p["output_size"]]              # (B, 2)
    z = z.reshape(B, 1, -1)                                              # (B, 1, 2) like torch
    return jnp.squeeze(z)                                                # matches .squeeze()


# ----------------------------------------------------------------------------- main
if __name__ == "__main__":
    key = jax.random.PRNGKey(0)
    kp, kx = jax.random.split(key)
    params = init_params(kp, hidden=256, output_size=2)

    B, H, W = 2, 32, 16                      # small shapes consistent with the module
    x = jax.random.normal(kx, (B, H, W), dtype=jnp.float32)

    out = forward(x, params)
    out = jax.block_until_ready(out)
    assert out.shape == (B, 2), out.shape
    assert bool(jnp.all(jnp.isfinite(out)))
    print("KERNEL_OK")
</pallas_src>

<mosaic_0001>
module attributes {stable_mosaic.version = 11 : i64} {
  func.func @_stem_kernel(%arg0: i32, %arg1: memref<1x256x3xf32, #tpu.memory_space<vmem>>, %arg2: memref<3x128xf32, #tpu.memory_space<vmem>>, %arg3: memref<1x128xf32, #tpu.memory_space<vmem>>, %arg4: memref<1x256x128xf32, #tpu.memory_space<vmem>>) attributes {dimension_semantics = [#tpu.dimension_semantics<parallel>], iteration_bounds = array<i64: 2>, scalar_prefetch = 0 : i64, scratch_operands = 0 : i64, tpu.core_type = #tpu.core_type<tc>, window_params = [{transform_indices = @transform_0, window_bounds = array<i64: 1, 256, 3>}, {pipeline_mode = #tpu.pipeline_mode<synchronous>, transform_indices = @transform_1, window_bounds = array<i64: 3, 128>}, {pipeline_mode = #tpu.pipeline_mode<synchronous>, transform_indices = @transform_2, window_bounds = array<i64: 1, 128>}, {transform_indices = @transform_3, window_bounds = array<i64: 1, 256, 128>}]} {
    %c0 = arith.constant 0 : index
    %c0_0 = arith.constant 0 : index
    %c0_1 = arith.constant 0 : index
    %0 = vector.load %arg1[%c0, %c0_0, %c0_1] : memref<1x256x3xf32, #tpu.memory_space<vmem>>, vector<1x256x3xf32>
    %1 = vector.shape_cast %0 : vector<1x256x3xf32> to vector<256x3xf32>
    %2 = vector.extract_strided_slice %1 {offsets = [0, 0], sizes = [256, 1], strides = [1, 1]} : vector<256x3xf32> to vector<256x1xf32>
    %c0_2 = arith.constant 0 : index
    %c0_3 = arith.constant 0 : index
    %3 = vector.load %arg2[%c0_2, %c0_3] : memref<3x128xf32, #tpu.memory_space<vmem>>, vector<1x128xf32>
    %4 = vector.broadcast %2 : vector<256x1xf32> to vector<256x128xf32>
    %5 = vector.broadcast %3 : vector<1x128xf32> to vector<256x128xf32>
    %6 = arith.mulf %4, %5 : vector<256x128xf32>
    %7 = vector.extract_strided_slice %1 {offsets = [0, 1], sizes = [256, 1], strides = [1, 1]} : vector<256x3xf32> to vector<256x1xf32>
    %c1 = arith.constant 1 : index
    %c0_4 = arith.constant 0 : index
    %8 = vector.load %arg2[%c1, %c0_4] : memref<3x128xf32, #tpu.memory_space<vmem>>, vector<1x128xf32>
    %9 = vector.broadcast %7 : vector<256x1xf32> to vector<256x128xf32>
    %10 = vector.broadcast %8 : vector<1x128xf32> to vector<256x128xf32>
    %11 = arith.mulf %9, %10 : vector<256x128xf32>
    %12 = arith.addf %6, %11 : vector<256x128xf32>
    %13 = vector.extract_strided_slice %1 {offsets = [0, 2], sizes = [256, 1], strides = [1, 1]} : vector<256x3xf32> to vector<256x1xf32>
    %c2 = arith.constant 2 : index
    %c0_5 = arith.constant 0 : index
    %14 = vector.load %arg2[%c2, %c0_5] : memref<3x128xf32, #tpu.memory_space<vmem>>, vector<1x128xf32>
    %15 = vector.broadcast %13 : vector<256x1xf32> to vector<256x128xf32>
    %16 = vector.broadcast %14 : vector<1x128xf32> to vector<256x128xf32>
    %17 = arith.mulf %15, %16 : vector<256x128xf32>
    %18 = arith.addf %12, %17 : vector<256x128xf32>
    %c0_6 = arith.constant 0 : index
    %c0_7 = arith.constant 0 : index
    %19 = vector.load %arg3[%c0_6, %c0_7] : memref<1x128xf32, #tpu.memory_space<vmem>>, vector<1x128xf32>
    %20 = vector.broadcast %19 : vector<1x128xf32> to vector<256x128xf32>
    %21 = arith.addf %18, %20 : vector<256x128xf32>
    %cst = arith.constant 3.000000e+00 : f32
    %22 = vector.broadcast %cst : f32 to vector<256x128xf32>
    %23 = arith.addf %21, %22 : vector<256x128xf32>
    %cst_8 = arith.constant 0.000000e+00 : f32
    %cst_9 = arith.constant 6.000000e+00 : f32
    %24 = vector.broadcast %cst_8 : f32 to vector<256x128xf32>
    %25 = arith.maximumf %24, %23 : vector<256x128xf32>
    %26 = vector.broadcast %cst_9 : f32 to vector<256x128xf32>
    %27 = arith.minimumf %26, %25 : vector<256x128xf32>
    %28 = arith.mulf %21, %27 : vector<256x128xf32>
    %cst_10 = arith.constant 0.166666672 : f32
    %29 = vector.broadcast %cst_10 : f32 to vector<256x128xf32>
    %30 = arith.mulf %28, %29 : vector<256x128xf32>
    %31 = vector.shape_cast %30 : vector<256x128xf32> to vector<1x256x128xf32>
    %c0_11 = arith.constant 0 : index
    %c0_12 = arith.constant 0 : index
    %c0_13 = arith.constant 0 : index
    %32 = vector.load %arg4[%c0_11, %c0_12, %c0_13] : memref<1x256x128xf32, #tpu.memory_space<vmem>>, vector<1x256x128xf32>
    tpu.vector_store %arg4[%c0_11, %c0_12, %c0_13], %31 {strides = array<i32>} : memref<1x256x128xf32, #tpu.memory_space<vmem>>, vector<1x256x128xf32>,
    return
  }
  func.func @transform_0(%arg0: i32) -> (i32, i32, i32) {
    %c0_i32 = arith.constant 0 : i32
    %c0_i32_0 = arith.constant 0 : i32
    %c0_i32_1 = arith.constant 0 : i32
    return %arg0, %c0_i32, %c0_i32_0 : i32, i32, i32
  }
  func.func @transform_1(%arg0: i32) -> (i32, i32) {
    %c0_i32 = arith.constant 0 : i32
    %c0_i32_0 = arith.constant 0 : i32
    %c0_i32_1 = arith.constant 0 : i32
    return %c0_i32, %c0_i32_0 : i32, i32
  }
  func.func @transform_2(%arg0: i32) -> (i32, i32) {
    %c0_i32 = arith.constant 0 : i32
    %c0_i32_0 = arith.constant 0 : i32
    %c0_i32_1 = arith.constant 0 : i32
    return %c0_i32, %c0_i32_0 : i32, i32
  }
  func.func @transform_3(%arg0: i32) -> (i32, i32, i32) {
    %c0_i32 = arith.constant 0 : i32
    %c0_i32_0 = arith.constant 0 : i32
    %c0_i32_1 = arith.constant 0 : i32
    return %arg0, %c0_i32, %c0_i32_0 : i32, i32, i32
  }
}

</mosaic_0001>

<llo_original>
// kernel: tpu_custom_call.1
$region0: #{tpu_custom_call.1}
  #allocation0 [shape = 'u32[]', space=smem, size = 0x4, offset = 0x4, fixed_abs, tag = 'smem constant byte address 0x4 - core index']
  #allocation1 [shape = 'u32[144,128]{1,0:T(1,128)}', space=vmem, size = 0x12000, scoped, tag = 'internal scratch']
  %s0 = inlined_call_operand.vmem [shape: f32[2,256,3], index: 0, kind: input, shape index: {}]
  %s1 = inlined_call_operand.vmem [shape: f32[3,128], index: 1, kind: input, shape index: {}]
  %s2 = inlined_call_operand.vmem [shape: f32[1,128], index: 2, kind: input, shape index: {}]
  %s3 = inlined_call_operand.hbm [shape: f32[2,256,128], index: 3, kind: output, shape index: {}]
  %s4 = sld [smem:[#allocation0]]
  $region45: #{tpu_custom_call.1} parent=0
    _
  %s6 = ssub.s32 1, %s4
  %s7 = scalar_select 0, %s6, %s4
  $region1: #{tpu_custom_call.1} parent=0
    #allocation2 [shape = 'u8[262144]{0}', space=vmem, size = 0x40000, scoped, tag = 'output window, operand 0']
    #allocation3 [shape = 's32[2]{0}', space=sflag, size = 0x8, scoped, tag = 'scoped memory for tpu_custom_call.1']
    %8 = vsyncpa [#allocation3], 0
    %s9 = scalar_lea.sflag [#allocation3], 1
    %10 = vsyncpa %s9, 0
    loop: start=0, step=1, limit=4
    $region2: #{tpu_custom_call.1} parent=1 // loop_pre_header
      _
    $region3: #{tpu_custom_call.1} parent=1 // loop_header
      %s12 = sphi 0, %s16
      %p13 = scmp.ge.s32.totalorder %s12, 4
      %s22 = sphi 0, %s24
      %s25 = sphi 0, %s22
      %s26 = sphi 0, %s25
      %s42 = sphi 0, %s26
      %s46 = sphi 0, %s46
      %s48 = sphi 0, %s46
      %s49 = sphi 0, %s48
      %s63 = sphi 0, %s49
      %s67 = sphi 0, %s67
      %s69 = sphi 0, %s67
      %s70 = sphi 0, %s69
      %s84 = sphi 0, %s70
      %s90 = sphi 0, %s92
      %s93 = sphi 0, %s90
      %s94 = sphi 0, %s93
      %s110 = sphi 0, %s94
    $region4: #{tpu_custom_call.1} parent=1 // loop_header_branch
      %15 = sbr.rel (%p13) target = $region8
    $region5: #{tpu_custom_call.1} parent=1 // loop_body
      %s17 = ssub.s32 %s12, 1
      %s18 = ssub.s32 %s12, 2
      %s19 = sadd.s32 %s12, 1
      %s20 = ssub.s32 %s12, %s19
      %p21 = scmp.eq.s32.totalorder %s20, 0
      %s23 = sadd.s32 %s22, 1
      %s24 = scalar_select %p21, %s22, %s23
      %p27 = pneg %p21
      %p28 = scmp.eq.s32.totalorder %s12, 1
      %p29 = por %p27, %p28
      %p30 = scmp.ne.s32.totalorder %s22, %s25
      %p31 = scmp.eq.s32.totalorder %s12, 0
      %p32 = por %p30, %p31
      %p33 = scmp.ne.s32.totalorder %s22, %s25
      %p34 = scmp.eq.s32.totalorder %s17, 1
      %p35 = por %p33, %p34
      %p36 = scmp.ne.s32.totalorder %s25, %s26
      %p37 = scmp.eq.s32.totalorder %s17, 0
      %p38 = por %p36, %p37
      %p39 = scmp.ne.s32.totalorder %s25, %s26
      %p40 = scmp.eq.s32.totalorder %s18, 1
      %p41 = por %p39, %p40
      %p43 = scmp.ne.s32.totalorder %s26, %s42
      %p44 = scmp.eq.s32.totalorder %s18, 0
      %p45 = por %p43, %p44
      %s47 = sadd.s32 %s46, 1
      %p50 = scmp.eq.s32.totalorder %s12, 1
      %p51 = scmp.ne.s32.totalorder %s46, %s48
      %p52 = scmp.eq.s32.totalorder %s12, 0
      %p53 = por %p51, %p52
      %p54 = scmp.ne.s32.totalorder %s46, %s48
      %p55 = scmp.eq.s32.totalorder %s17, 1
      %p56 = por %p54, %p55
      %p57 = scmp.ne.s32.totalorder %s48, %s49
      %p58 = scmp.eq.s32.totalorder %s17, 0
      %p59 = por %p57, %p58
      %p60 = scmp.ne.s32.totalorder %s48, %s49
      %p61 = scmp.eq.s32.totalorder %s18, 1
      %p62 = por %p60, %p61
      %p64 = scmp.ne.s32.totalorder %s49, %s63
      %p65 = scmp.eq.s32.totalorder %s18, 0
      %p66 = por %p64, %p65
      %s68 = sadd.s32 %s67, 1
      %p71 = scmp.eq.s32.totalorder %s12, 1
      %p72 = scmp.ne.s32.totalorder %s67, %s69
      %p73 = scmp.eq.s32.totalorder %s12, 0
      %p74 = por %p72, %p73
      %p75 = scmp.ne.s32.totalorder %s67, %s69
      %p76 = scmp.eq.s32.totalorder %s17, 1
      %p77 = por %p75, %p76
      %p78 = scmp.ne.s32.totalorder %s69, %s70
      %p79 = scmp.eq.s32.totalorder %s17, 0
      %p80 = por %p78, %p79
      %p81 = scmp.ne.s32.totalorder %s69, %s70
      %p82 = scmp.eq.s32.totalorder %s18, 1
      %p83 = por %p81, %p82
      %p85 = scmp.ne.s32.totalorder %s70, %s84
      %p86 = scmp.eq.s32.totalorder %s18, 0
      %p87 = por %p85, %p86
      %s88 = ssub.s32 %s12, %s19
      %p89 = scmp.eq.s32.totalorder %s88, 0
      %s91 = sadd.s32 %s90, 1
      %s92 = scalar_select %p89, %s90, %s91
      %p95 = pneg %p89
      %p96 = scmp.eq.s32.totalorder %s12, 1
      %p97 = por %p95, %p96
      %p98 = scmp.ne.s32.totalorder %s90, %s93
      %p99 = scmp.eq.s32.totalorder %s12, 0
      %p100 = por %p98, %p99
      %p101 = scmp.ne.s32.totalorder %s90, %s93
      %p102 = scmp.eq.s32.totalorder %s17, 1
      %p103 = por %p101, %p102
      %p104 = scmp.ne.s32.totalorder %s93, %s94
      %p105 = scmp.eq.s32.totalorder %s17, 0
      %p106 = por %p104, %p105
      %p107 = scmp.ne.s32.totalorder %s93, %s94
      %p108 = scmp.eq.s32.totalorder %s18, 1
      %p109 = por %p107, %p108
      %p111 = scmp.ne.s32.totalorder %s94, %s110
      %p112 = scmp.eq.s32.totalorder %s18, 0
      %p113 = por %p111, %p112
      %p114 = scmp.le.s32.totalorder 1, %s12
      %p115 = scmp.lt.s32.totalorder %s12, 3
      %p116 = pnand %p114, %p115
      %p117 = pneg %p116
      // Predicated region
      $region9: #{tpu_custom_call.1} parent=5 // pred_check
        _
      $region10: #{tpu_custom_call.1} parent=5 // pred_check_branch
        %119 = sbr.rel (%p116) target = $region12
      $region11: #{tpu_custom_call.1} parent=5 // pred_region
        %s120 = ssub.s32 %s12, 1
        // Predicated region
        $region13: #{tpu_custom_call.1} parent=11 // pred_check
          %p121 = pneg %p59
        $region14: #{tpu_custom_call.1} parent=11 // pred_check_branch
          %123 = sbr.rel (%p121) target = $region16
        $region15: #{tpu_custom_call.1} parent=11 // pred_region
          _
        $region16: #{tpu_custom_call.1} parent=11 // pred_fallthru
          _
        // Predicated region
        $region17: #{tpu_custom_call.1} parent=11 // pred_check
          %p124 = pneg %p80
        $region18: #{tpu_custom_call.1} parent=11 // pred_check_branch
          %126 = sbr.rel (%p124) target = $region20
        $region19: #{tpu_custom_call.1} parent=11 // pred_region
          _
        $region20: #{tpu_custom_call.1} parent=11 // pred_fallthru
          _
      $region12: #{tpu_custom_call.1} parent=5 // pred_fallthru
        _
      %p127 = scmp.lt.s32.totalorder %s12, 2
      // Predicated region
      $region21: #{tpu_custom_call.1} parent=5 // pred_check
        %p128 = pneg %p127
      $region22: #{tpu_custom_call.1} parent=5 // pred_check_branch
        %130 = sbr.rel (%p128) target = $region24
      $region23: #{tpu_custom_call.1} parent=5 // pred_region
        // Predicated region
        $region25: #{tpu_custom_call.1} parent=23 // pred_check
          %p131 = pneg %p32
        $region26: #{tpu_custom_call.1} parent=23 // pred_check_branch
          %133 = sbr.rel (%p131) target = $region28
        $region27: #{tpu_custom_call.1} parent=23 // pred_region
          %p134 = scmp.lt.s32.totalorder %s12, 1
          %s135 = scalar_select %p134, %s12, 1
          %s136 = smul.addr %s135, 32
          %s137 = smul.addr %s136, 8
          %s138 = scalar_lea.vmem %s0, %s137
        $region28: #{tpu_custom_call.1} parent=23 // pred_fallthru
          _
      $region24: #{tpu_custom_call.1} parent=5 // pred_fallthru
        _
      %p139 = scmp.le.s32.totalorder 1, %s12
      %p140 = scmp.lt.s32.totalorder %s12, 3
      %p141 = pnand %p139, %p140
      %p142 = pneg %p141
      // Predicated region
      $region29: #{tpu_custom_call.1} parent=5 // pred_check
        _
      $region30: #{tpu_custom_call.1} parent=5 // pred_check_branch
        %144 = sbr.rel (%p141) target = $region32
      $region31: #{tpu_custom_call.1} parent=5 // pred_region
        %s145 = ssub.s32 %s12, 1
        %p146 = scmp.lt.s32.totalorder %s17, 1
        %s147 = scalar_select %p146, %s17, 1
        %s148 = smul.addr %s147, 32
        %s149 = smul.addr %s148, 8
        %s150 = scalar_lea.vmem %s0, %s149
        %p151 = pneg %p38
        %p152 = pneg %p35
        %p153 = pneg %p59
        %p154 = pneg %p56
        %p155 = pneg %p80
        %p156 = pneg %p77
        %p157 = pneg %p106
        %p158 = pneg %p103
        %s159 = sand.u32 %s93, 1
        %s160 = scalar_lea.sflag [#allocation3], %s159
        %s161 = sand.u32 %s93, 1
        %s162 = smul.addr %s161, 256
        %s163 = scalar_lea.vmem [#allocation2], %s162
        %p164 = scmp.lt.s32.totalorder %s17, 1
        %s165 = scalar_select %p164, %s17, 1
        %s166 = smul.addr %s165, 32
        %s167 = smul.addr %s166, 8
        %s168 = scalar_lea.vmem %s0, %s167
        %v169 = vld [vmem:[%s168] sm:$0xff]
        %v170 = vld [vmem:[%s168 + $0x8] sm:$0xff]
        %v171 = vld [vmem:[%s168 + $0x10] sm:$0xff]
        %v172 = vld [vmem:[%s168 + $0x18] sm:$0xff]
        %v173 = vld [vmem:[%s168 + $0x20] sm:$0xff]
        %v174 = vld [vmem:[%s168 + $0x28] sm:$0xff]
        %v175 = vld [vmem:[%s168 + $0x30] sm:$0xff]
        %v176 = vld [vmem:[%s168 + $0x38] sm:$0xff]
        %v177 = vld [vmem:[%s168 + $0x40] sm:$0xff]
        %v178 = vld [vmem:[%s168 + $0x48] sm:$0xff]
        %v179 = vld [vmem:[%s168 + $0x50] sm:$0xff]
        %v180 = vld [vmem:[%s168 + $0x58] sm:$0xff]
        %v181 = vld [vmem:[%s168 + $0x60] sm:$0xff]
        %v182 = vld [vmem:[%s168 + $0x68] sm:$0xff]
        %v183 = vld [vmem:[%s168 + $0x70] sm:$0xff]
        %v184 = vld [vmem:[%s168 + $0x78] sm:$0xff]
        %v185 = vld [vmem:[%s168 + $0x80] sm:$0xff]
        %v186 = vld [vmem:[%s168 + $0x88] sm:$0xff]
        %v187 = vld [vmem:[%s168 + $0x90] sm:$0xff]
        %v188 = vld [vmem:[%s168 + $0x98] sm:$0xff]
        %v189 = vld [vmem:[%s168 + $0xa0] sm:$0xff]
        %v190 = vld [vmem:[%s168 + $0xa8] sm:$0xff]
        %v191 = vld [vmem:[%s168 + $0xb0] sm:$0xff]
        %v192 = vld [vmem:[%s168 + $0xb8] sm:$0xff]
        %v193 = vld [vmem:[%s168 + $0xc0] sm:$0xff]
        %v194 = vld [vmem:[%s168 + $0xc8] sm:$0xff]
        %v195 = vld [vmem:[%s168 + $0xd0] sm:$0xff]
        %v196 = vld [vmem:[%s168 + $0xd8] sm:$0xff]
        %v197 = vld [vmem:[%s168 + $0xe0] sm:$0xff]
        %v198 = vld [vmem:[%s168 + $0xe8] sm:$0xff]
        %v199 = vld [vmem:[%s168 + $0xf0] sm:$0xff]
        %v200 = vld [vmem:[%s168 + $0xf8] sm:$0xff]
        %v201 = vld [vmem:[%s1] sm:$0x1]
        %203 = vset.pattern.permute.xlu0 0
        %204 = vperm.xlu0 %203, %v169
        %v205 = vpop.permute.xlu0 %204
        %208 = vset.pattern.permute.xlu0 0
        %209 = vperm.xlu0 %208, %v170
        %v210 = vpop.permute.xlu0 %209
        %213 = vset.pattern.permute.xlu0 0
        %214 = vperm.xlu0 %213, %v171
        %v215 = vpop.permute.xlu0 %214
        %218 = vset.pattern.permute.xlu0 0
        %219 = vperm.xlu0 %218, %v172
        %v220 = vpop.permute.xlu0 %219
        %223 = vset.pattern.permute.xlu0 0
        %224 = vperm.xlu0 %223, %v173
        %v225 = vpop.permute.xlu0 %224
        %228 = vset.pattern.permute.xlu0 0
        %229 = vperm.xlu0 %228, %v174
        %v230 = vpop.permute.xlu0 %229
        %233 = vset.pattern.permute.xlu0 0
        %234 = vperm.xlu0 %233, %v175
        %v235 = vpop.permute.xlu0 %234
        %238 = vset.pattern.permute.xlu0 0
        %239 = vperm.xlu0 %238, %v176
        %v240 = vpop.permute.xlu0 %239
        %243 = vset.pattern.permute.xlu0 0
        %244 = vperm.xlu0 %243, %v177
        %v245 = vpop.permute.xlu0 %244
        %248 = vset.pattern.permute.xlu0 0
        %249 = vperm.xlu0 %248, %v178
        %v250 = vpop.permute.xlu0 %249
        %253 = vset.pattern.permute.xlu0 0
        %254 = vperm.xlu0 %253, %v179
        %v255 = vpop.permute.xlu0 %254
        %258 = vset.pattern.permute.xlu0 0
        %259 = vperm.xlu0 %258, %v180
        %v260 = vpop.permute.xlu0 %259
        %263 = vset.pattern.permute.xlu0 0
        %264 = vperm.xlu0 %263, %v181
        %v265 = vpop.permute.xlu0 %264
        %268 = vset.pattern.permute.xlu0 0
        %269 = vperm.xlu0 %268, %v182
        %v270 = vpop.permute.xlu0 %269
        %273 = vset.pattern.permute.xlu0 0
        %274 = vperm.xlu0 %273, %v183
        %v275 = vpop.permute.xlu0 %274
        %278 = vset.pattern.permute.xlu0 0
        %279 = vperm.xlu0 %278, %v184
        %v280 = vpop.permute.xlu0 %279
        %283 = vset.pattern.permute.xlu0 0
        %284 = vperm.xlu0 %283, %v185
        %v285 = vpop.permute.xlu0 %284
        %288 = vset.pattern.permute.xlu0 0
        %289 = vperm.xlu0 %288, %v186
        %v290 = vpop.permute.xlu0 %289
        %293 = vset.pattern.permute.xlu0 0
        %294 = vperm.xlu0 %293, %v187
        %v295 = vpop.permute.xlu0 %294
        %298 = vset.pattern.permute.xlu0 0
        %299 = vperm.xlu0 %298, %v188
        %v300 = vpop.permute.xlu0 %299
        %303 = vset.pattern.permute.xlu0 0
        %304 = vperm.xlu0 %303, %v189
        %v305 = vpop.permute.xlu0 %304
        %308 = vset.pattern.permute.xlu0 0
        %309 = vperm.xlu0 %308, %v190
        %v310 = vpop.permute.xlu0 %309
        %313 = vset.pattern.permute.xlu0 0
        %314 = vperm.xlu0 %313, %v191
        %v315 = vpop.permute.xlu0 %314
        %318 = vset.pattern.permute.xlu0 0
        %319 = vperm.xlu0 %318, %v192
        %v320 = vpop.permute.xlu0 %319
        %323 = vset.pattern.permute.xlu0 0
        %324 = vperm.xlu0 %323, %v193
        %v325 = vpop.permute.xlu0 %324
        %328 = vset.pattern.permute.xlu0 0
        %329 = vperm.xlu0 %328, %v194
        %v330 = vpop.permute.xlu0 %329
        %333 = vset.pattern.permute.xlu0 0
        %334 = vperm.xlu0 %333, %v195
        %v335 = vpop.permute.xlu0 %334
        %338 = vset.pattern.permute.xlu0 0
        %339 = vperm.xlu0 %338, %v196
        %v340 = vpop.permute.xlu0 %339
        %343 = vset.pattern.permute.xlu0 0
        %344 = vperm.xlu0 %343, %v197
        %v345 = vpop.permute.xlu0 %344
        %348 = vset.pattern.permute.xlu0 0
        %349 = vperm.xlu0 %348, %v198
        %v350 = vpop.permute.xlu0 %349
        %353 = vset.pattern.permute.xlu0 0
        %354 = vperm.xlu0 %353, %v199
        %v355 = vpop.permute.xlu0 %354
        %358 = vset.pattern.permute.xlu0 0
        %359 = vperm.xlu0 %358, %v200
        %v360 = vpop.permute.xlu0 %359
        %v362 = vlaneseq
        %v363 = vshrl.u32 %v362, 7
        %v364 = vsub.s32 0, %v363
        %v365 = vrot.slane %v201, %v364
        %v366 = vmul.f32 %v205, %v365
        %v367 = vmul.f32 %v210, %v365
        %v368 = vmul.f32 %v215, %v365
        %v369 = vmul.f32 %v220, %v365
        %v370 = vmul.f32 %v225, %v365
        %v371 = vmul.f32 %v230, %v365
        %v372 = vmul.f32 %v235, %v365
        %v373 = vmul.f32 %v240, %v365
        %v374 = vmul.f32 %v245, %v365
        %v375 = vmul.f32 %v250, %v365
        %v376 = vmul.f32 %v255, %v365
        %v377 = vmul.f32 %v260, %v365
        %v378 = vmul.f32 %v265, %v365
        %v379 = vmul.f32 %v270, %v365
        %v380 = vmul.f32 %v275, %v365
        %v381 = vmul.f32 %v280, %v365
        %v382 = vmul.f32 %v285, %v365
        %v383 = vmul.f32 %v290, %v365
        %v384 = vmul.f32 %v295, %v365
        %v385 = vmul.f32 %v300, %v365
        %v386 = vmul.f32 %v305, %v365
        %v387 = vmul.f32 %v310, %v365
        %v388 = vmul.f32 %v315, %v365
        %v389 = vmul.f32 %v320, %v365
        %v390 = vmul.f32 %v325, %v365
        %v391 = vmul.f32 %v330, %v365
        %v392 = vmul.f32 %v335, %v365
        %v393 = vmul.f32 %v340, %v365
        %v394 = vmul.f32 %v345, %v365
        %v395 = vmul.f32 %v350, %v365
        %v396 = vmul.f32 %v355, %v365
        %v397 = vmul.f32 %v360, %v365
        %v398 = vld [vmem:[%s1 + $0x1] sm:$0x1]
        %399 = vset.pattern.permute.xlu0 1
        %400 = vperm.xlu0 %399, %v169
        %v401 = vpop.permute.xlu0 %400
        %403 = vset.pattern.permute.xlu0 1
        %404 = vperm.xlu0 %403, %v170
        %v405 = vpop.permute.xlu0 %404
        %407 = vset.pattern.permute.xlu0 1
        %408 = vperm.xlu0 %407, %v171
        %v409 = vpop.permute.xlu0 %408
        %411 = vset.pattern.permute.xlu0 1
        %412 = vperm.xlu0 %411, %v172
        %v413 = vpop.permute.xlu0 %412
        %415 = vset.pattern.permute.xlu0 1
        %416 = vperm.xlu0 %415, %v173
        %v417 = vpop.permute.xlu0 %416
        %419 = vset.pattern.permute.xlu0 1
        %420 = vperm.xlu0 %419, %v174
        %v421 = vpop.permute.xlu0 %420
        %423 = vset.pattern.permute.xlu0 1
        %424 = vperm.xlu0 %423, %v175
        %v425 = vpop.permute.xlu0 %424
        %427 = vset.pattern.permute.xlu0 1
        %428 = vperm.xlu0 %427, %v176
        %v429 = vpop.permute.xlu0 %428
        %431 = vset.pattern.permute.xlu0 1
        %432 = vperm.xlu0 %431, %v177
        %v433 = vpop.permute.xlu0 %432
        %435 = vset.pattern.permute.xlu0 1
        %436 = vperm.xlu0 %435, %v178
        %v437 = vpop.permute.xlu0 %436
        %439 = vset.pattern.permute.xlu0 1
        %440 = vperm.xlu0 %439, %v179
        %v441 = vpop.permute.xlu0 %440
        %443 = vset.pattern.permute.xlu0 1
        %444 = vperm.xlu0 %443, %v180
        %v445 = vpop.permute.xlu0 %444
        %447 = vset.pattern.permute.xlu0 1
        %448 = vperm.xlu0 %447, %v181
        %v449 = vpop.permute.xlu0 %448
        %451 = vset.pattern.permute.xlu0 1
        %452 = vperm.xlu0 %451, %v182
        %v453 = vpop.permute.xlu0 %452
        %455 = vset.pattern.permute.xlu0 1
        %456 = vperm.xlu0 %455, %v183
        %v457 = vpop.permute.xlu0 %456
        %459 = vset.pattern.permute.xlu0 1
        %460 = vperm.xlu0 %459, %v184
        %v461 = vpop.permute.xlu0 %460
        %463 = vset.pattern.permute.xlu0 1
        %464 = vperm.xlu0 %463, %v185
        %v465 = vpop.permute.xlu0 %464
        %467 = vset.pattern.permute.xlu0 1
        %468 = vperm.xlu0 %467, %v186
        %v469 = vpop.permute.xlu0 %468
        %471 = vset.pattern.permute.xlu0 1
        %472 = vperm.xlu0 %471, %v187
        %v473 = vpop.permute.xlu0 %472
        %475 = vset.pattern.permute.xlu0 1
        %476 = vperm.xlu0 %475, %v188
        %v477 = vpop.permute.xlu0 %476
        %479 = vset.pattern.permute.xlu0 1
        %480 = vperm.xlu0 %479, %v189
        %v481 = vpop.permute.xlu0 %480
        %483 = vset.pattern.permute.xlu0 1
        %484 = vperm.xlu0 %483, %v190
        %v485 = vpop.permute.xlu0 %484
        %487 = vset.pattern.permute.xlu0 1
        %488 = vperm.xlu0 %487, %v191
        %v489 = vpop.permute.xlu0 %488
        %491 = vset.pattern.permute.xlu0 1
        %492 = vperm.xlu0 %491, %v192
        %v493 = vpop.permute.xlu0 %492
        %495 = vset.pattern.permute.xlu0 1
        %496 = vperm.xlu0 %495, %v193
        %v497 = vpop.permute.xlu0 %496
        %499 = vset.pattern.permute.xlu0 1
        %500 = vperm.xlu0 %499, %v194
        %v501 = vpop.permute.xlu0 %500
        %503 = vset.pattern.permute.xlu0 1
        %504 = vperm.xlu0 %503, %v195
        %v505 = vpop.permute.xlu0 %504
        %507 = vset.pattern.permute.xlu0 1
        %508 = vperm.xlu0 %507, %v196
        %v509 = vpop.permute.xlu0 %508
        %511 = vset.pattern.permute.xlu0 1
        %512 = vperm.xlu0 %511, %v197
        %v513 = vpop.permute.xlu0 %512
        %515 = vset.pattern.permute.xlu0 1
        %516 = vperm.xlu0 %515, %v198
        %v517 = vpop.permute.xlu0 %516
        %519 = vset.pattern.permute.xlu0 1
        %520 = vperm.xlu0 %519, %v199
        %v521 = vpop.permute.xlu0 %520
        %523 = vset.pattern.permute.xlu0 1
        %524 = vperm.xlu0 %523, %v200
        %v525 = vpop.permute.xlu0 %524
        %v527 = vlaneseq
        %v528 = vshrl.u32 %v527, 7
        %v529 = vsub.s32 0, %v528
        %v530 = vrot.slane %v398, %v529
        %v531 = vmul.f32 %v401, %v530
        %v532 = vmul.f32 %v405, %v530
        %v533 = vmul.f32 %v409, %v530
        %v534 = vmul.f32 %v413, %v530
        %v535 = vmul.f32 %v417, %v530
        %v536 = vmul.f32 %v421, %v530
        %v537 = vmul.f32 %v425, %v530
        %v538 = vmul.f32 %v429, %v530
        %v539 = vmul.f32 %v433, %v530
        %v540 = vmul.f32 %v437, %v530
        %v541 = vmul.f32 %v441, %v530
        %v542 = vmul.f32 %v445, %v530
        %v543 = vmul.f32 %v449, %v530
        %v544 = vmul.f32 %v453, %v530
        %v545 = vmul.f32 %v457, %v530
        %v546 = vmul.f32 %v461, %v530
        %v547 = vmul.f32 %v465, %v530
        %v548 = vmul.f32 %v469, %v530
        %v549 = vmul.f32 %v473, %v530
        %v550 = vmul.f32 %v477, %v530
        %v551 = vmul.f32 %v481, %v530
        %v552 = vmul.f32 %v485, %v530
        %v553 = vmul.f32 %v489, %v530
        %v554 = vmul.f32 %v493, %v530
        %v555 = vmul.f32 %v497, %v530
        %v556 = vmul.f32 %v501, %v530
        %v557 = vmul.f32 %v505, %v530
        %v558 = vmul.f32 %v509, %v530
        %v559 = vmul.f32 %v513, %v530
        %v560 = vmul.f32 %v517, %v530
        %v561 = vmul.f32 %v521, %v530
        %v562 = vmul.f32 %v525, %v530
        %v563 = vadd.f32 %v366, %v531
        %v564 = vadd.f32 %v367, %v532
        %v565 = vadd.f32 %v368, %v533
        %v566 = vadd.f32 %v369, %v534
        %v567 = vadd.f32 %v370, %v535
        %v568 = vadd.f32 %v371, %v536
        %v569 = vadd.f32 %v372, %v537
        %v570 = vadd.f32 %v373, %v538
        %v571 = vadd.f32 %v374, %v539
        %v572 = vadd.f32 %v375, %v540
        %v573 = vadd.f32 %v376, %v541
        %v574 = vadd.f32 %v377, %v542
        %v575 = vadd.f32 %v378, %v543
        %v576 = vadd.f32 %v379, %v544
        %v577 = vadd.f32 %v380, %v545
        %v578 = vadd.f32 %v381, %v546
        %v579 = vadd.f32 %v382, %v547
        %v580 = vadd.f32 %v383, %v548
        %v581 = vadd.f32 %v384, %v549
        %v582 = vadd.f32 %v385, %v550
        %v583 = vadd.f32 %v386, %v551
        %v584 = vadd.f32 %v387, %v552
        %v585 = vadd.f32 %v388, %v553
        %v586 = vadd.f32 %v389, %v554
        %v587 = vadd.f32 %v390, %v555
        %v588 = vadd.f32 %v391, %v556
        %v589 = vadd.f32 %v392, %v557
        %v590 = vadd.f32 %v393, %v558
        %v591 = vadd.f32 %v394, %v559
        %v592 = vadd.f32 %v395, %v560
        %v593 = vadd.f32 %v396, %v561
        %v594 = vadd.f32 %v397, %v562
        %v595 = vld [vmem:[%s1 + $0x2] sm:$0x1]
        %596 = vset.pattern.permute.xlu0 2
        %597 = vperm.xlu0 %596, %v169
        %v598 = vpop.permute.xlu0 %597
        %600 = vset.pattern.permute.xlu0 2
        %601 = vperm.xlu0 %600, %v170
        %v602 = vpop.permute.xlu0 %601
        %604 = vset.pattern.permute.xlu0 2
        %605 = vperm.xlu0 %604, %v171
        %v606 = vpop.permute.xlu0 %605
        %608 = vset.pattern.permute.xlu0 2
        %609 = vperm.xlu0 %608, %v172
        %v610 = vpop.permute.xlu0 %609
        %612 = vset.pattern.permute.xlu0 2
        %613 = vperm.xlu0 %612, %v173
        %v614 = vpop.permute.xlu0 %613
        %616 = vset.pattern.permute.xlu0 2
        %617 = vperm.xlu0 %616, %v174
        %v618 = vpop.permute.xlu0 %617
        %620 = vset.pattern.permute.xlu0 2
        %621 = vperm.xlu0 %620, %v175
        %v622 = vpop.permute.xlu0 %621
        %624 = vset.pattern.permute.xlu0 2
        %625 = vperm.xlu0 %624, %v176
        %v626 = vpop.permute.xlu0 %625
        %628 = vset.pattern.permute.xlu0 2
        %629 = vperm.xlu0 %628, %v177
        %v630 = vpop.permute.xlu0 %629
        %632 = vset.pattern.permute.xlu0 2
        %633 = vperm.xlu0 %632, %v178
        %v634 = vpop.permute.xlu0 %633
        %636 = vset.pattern.permute.xlu0 2
        %637 = vperm.xlu0 %636, %v179
        %v638 = vpop.permute.xlu0 %637
        %640 = vset.pattern.permute.xlu0 2
        %641 = vperm.xlu0 %640, %v180
        %v642 = vpop.permute.xlu0 %641
        %644 = vset.pattern.permute.xlu0 2
        %645 = vperm.xlu0 %644, %v181
        %v646 = vpop.permute.xlu0 %645
        %648 = vset.pattern.permute.xlu0 2
        %649 = vperm.xlu0 %648, %v182
        %v650 = vpop.permute.xlu0 %649
        %652 = vset.pattern.permute.xlu0 2
        %653 = vperm.xlu0 %652, %v183
        %v654 = vpop.permute.xlu0 %653
        %656 = vset.pattern.permute.xlu0 2
        %657 = vperm.xlu0 %656, %v184
        %v658 = vpop.permute.xlu0 %657
        %660 = vset.pattern.permute.xlu0 2
        %661 = vperm.xlu0 %660, %v185
        %v662 = vpop.permute.xlu0 %661
        %664 = vset.pattern.permute.xlu0 2
        %665 = vperm.xlu0 %664, %v186
        %v666 = vpop.permute.xlu0 %665
        %668 = vset.pattern.permute.xlu0 2
        %669 = vperm.xlu0 %668, %v187
        %v670 = vpop.permute.xlu0 %669
        %672 = vset.pattern.permute.xlu0 2
        %673 = vperm.xlu0 %672, %v188
        %v674 = vpop.permute.xlu0 %673
        %676 = vset.pattern.permute.xlu0 2
        %677 = vperm.xlu0 %676, %v189
        %v678 = vpop.permute.xlu0 %677
        %680 = vset.pattern.permute.xlu0 2
        %681 = vperm.xlu0 %680, %v190
        %v682 = vpop.permute.xlu0 %681
        %684 = vset.pattern.permute.xlu0 2
        %685 = vperm.xlu0 %684, %v191
        %v686 = vpop.permute.xlu0 %685
        %688 = vset.pattern.permute.xlu0 2
        %689 = vperm.xlu0 %688, %v192
        %v690 = vpop.permute.xlu0 %689
        %692 = vset.pattern.permute.xlu0 2
        %693 = vperm.xlu0 %692, %v193
        %v694 = vpop.permute.xlu0 %693
        %696 = vset.pattern.permute.xlu0 2
        %697 = vperm.xlu0 %696, %v194
        %v698 = vpop.permute.xlu0 %697
        %700 = vset.pattern.permute.xlu0 2
        %701 = vperm.xlu0 %700, %v195
        %v702 = vpop.permute.xlu0 %701
        %704 = vset.pattern.permute.xlu0 2
        %705 = vperm.xlu0 %704, %v196
        %v706 = vpop.permute.xlu0 %705
        %708 = vset.pattern.permute.xlu0 2
        %709 = vperm.xlu0 %708, %v197
        %v710 = vpop.permute.xlu0 %709
        %712 = vset.pattern.permute.xlu0 2
        %713 = vperm.xlu0 %712, %v198
        %v714 = vpop.permute.xlu0 %713
        %716 = vset.pattern.permute.xlu0 2
        %717 = vperm.xlu0 %716, %v199
        %v718 = vpop.permute.xlu0 %717
        %720 = vset.pattern.permute.xlu0 2
        %721 = vperm.xlu0 %720, %v200
        %v722 = vpop.permute.xlu0 %721
        %v724 = vlaneseq
        %v725 = vshrl.u32 %v724, 7
        %v726 = vsub.s32 0, %v725
        %v727 = vrot.slane %v595, %v726
        %v728 = vmul.f32 %v598, %v727
        %v729 = vmul.f32 %v602, %v727
        %v730 = vmul.f32 %v606, %v727
        %v731 = vmul.f32 %v610, %v727
        %v732 = vmul.f32 %v614, %v727
        %v733 = vmul.f32 %v618, %v727
        %v734 = vmul.f32 %v622, %v727
        %v735 = vmul.f32 %v626, %v727
        %v736 = vmul.f32 %v630, %v727
        %v737 = vmul.f32 %v634, %v727
        %v738 = vmul.f32 %v638, %v727
        %v739 = vmul.f32 %v642, %v727
        %v740 = vmul.f32 %v646, %v727
        %v741 = vmul.f32 %v650, %v727
        %v742 = vmul.f32 %v654, %v727
        %v743 = vmul.f32 %v658, %v727
        %v744 = vmul.f32 %v662, %v727
        %v745 = vmul.f32 %v666, %v727
        %v746 = vmul.f32 %v670, %v727
        %v747 = vmul.f32 %v674, %v727
        %v748 = vmul.f32 %v678, %v727
        %v749 = vmul.f32 %v682, %v727
        %v750 = vmul.f32 %v686, %v727
        %v751 = vmul.f32 %v690, %v727
        %v752 = vmul.f32 %v694, %v727
        %v753 = vmul.f32 %v698, %v727
        %v754 = vmul.f32 %v702, %v727
        %v755 = vmul.f32 %v706, %v727
        %v756 = vmul.f32 %v710, %v727
        %v757 = vmul.f32 %v714, %v727
        %v758 = vmul.f32 %v718, %v727
        %v759 = vmul.f32 %v722, %v727
        %v760 = vadd.f32 %v563, %v728
        %v761 = vadd.f32 %v564, %v729
        %v762 = vadd.f32 %v565, %v730
        %v763 = vadd.f32 %v566, %v731
        %v764 = vadd.f32 %v567, %v732
        %v765 = vadd.f32 %v568, %v733
        %v766 = vadd.f32 %v569, %v734
        %v767 = vadd.f32 %v570, %v735
        %v768 = vadd.f32 %v571, %v736
        %v769 = vadd.f32 %v572, %v737
        %v770 = vadd.f32 %v573, %v738
        %v771 = vadd.f32 %v574, %v739
        %v772 = vadd.f32 %v575, %v740
        %v773 = vadd.f32 %v576, %v741
        %v774 = vadd.f32 %v577, %v742
        %v775 = vadd.f32 %v578, %v743
        %v776 = vadd.f32 %v579, %v744
        %v777 = vadd.f32 %v580, %v745
        %v778 = vadd.f32 %v581, %v746
        %v779 = vadd.f32 %v582, %v747
        %v780 = vadd.f32 %v583, %v748
        %v781 = vadd.f32 %v584, %v749
        %v782 = vadd.f32 %v585, %v750
        %v783 = vadd.f32 %v586, %v751
        %v784 = vadd.f32 %v587, %v752
        %v785 = vadd.f32 %v588, %v753
        %v786 = vadd.f32 %v589, %v754
        %v787 = vadd.f32 %v590, %v755
        %v788 = vadd.f32 %v591, %v756
        %v789 = vadd.f32 %v592, %v757
        %v790 = vadd.f32 %v593, %v758
        %v791 = vadd.f32 %v594, %v759
        %v792 = vld [vmem:[%s2] sm:$0x1]
        %v794 = vlaneseq
        %v795 = vshrl.u32 %v794, 7
        %v796 = vsub.s32 0, %v795
        %v797 = vrot.slane %v792, %v796
        %v799 = vadd.f32 %v760, %v797
        %v800 = vadd.f32 %v761, %v797
        %v801 = vadd.f32 %v762, %v797
        %v802 = vadd.f32 %v763, %v797
        %v803 = vadd.f32 %v764, %v797
        %v804 = vadd.f32 %v765, %v797
        %v805 = vadd.f32 %v766, %v797
        %v806 = vadd.f32 %v767, %v797
        %v807 = vadd.f32 %v768, %v797
        %v808 = vadd.f32 %v769, %v797
        %v809 = vadd.f32 %v770, %v797
        %v810 = vadd.f32 %v771, %v797
        %v811 = vadd.f32 %v772, %v797
        %v812 = vadd.f32 %v773, %v797
        %v813 = vadd.f32 %v774, %v797
        %v814 = vadd.f32 %v775, %v797
        %v815 = vadd.f32 %v776, %v797
        %v816 = vadd.f32 %v777, %v797
        %v817 = vadd.f32 %v778, %v797
        %v818 = vadd.f32 %v779, %v797
        %v819 = vadd.f32 %v780, %v797
        %v820 = vadd.f32 %v781, %v797
        %v821 = vadd.f32 %v782, %v797
        %v822 = vadd.f32 %v783, %v797
        %v823 = vadd.f32 %v784, %v797
        %v824 = vadd.f32 %v785, %v797
        %v825 = vadd.f32 %v786, %v797
        %v826 = vadd.f32 %v787, %v797
        %v827 = vadd.f32 %v788, %v797
        %v828 = vadd.f32 %v789, %v797
        %v829 = vadd.f32 %v790, %v797
        %v830 = vadd.f32 %v791, %v797
        %v831 = vadd.f32 %v799, 3.0
        %v832 = vadd.f32 %v800, 3.0
        %v833 = vadd.f32 %v801, 3.0
        %v834 = vadd.f32 %v802, 3.0
        %v835 = vadd.f32 %v803, 3.0
        %v836 = vadd.f32 %v804, 3.0
        %v837 = vadd.f32 %v805, 3.0
        %v838 = vadd.f32 %v806, 3.0
        %v839 = vadd.f32 %v807, 3.0
        %v840 = vadd.f32 %v808, 3.0
        %v841 = vadd.f32 %v809, 3.0
        %v842 = vadd.f32 %v810, 3.0
        %v843 = vadd.f32 %v811, 3.0
        %v844 = vadd.f32 %v812, 3.0
        %v845 = vadd.f32 %v813, 3.0
        %v846 = vadd.f32 %v814, 3.0
        %v847 = vadd.f32 %v815, 3.0
        %v848 = vadd.f32 %v816, 3.0
        %v849 = vadd.f32 %v817, 3.0
        %v850 = vadd.f32 %v818, 3.0
        %v851 = vadd.f32 %v819, 3.0
        %v852 = vadd.f32 %v820, 3.0
        %v853 = vadd.f32 %v821, 3.0
        %v854 = vadd.f32 %v822, 3.0
        %v855 = vadd.f32 %v823, 3.0
        %v856 = vadd.f32 %v824, 3.0
        %v857 = vadd.f32 %v825, 3.0
        %v858 = vadd.f32 %v826, 3.0
        %v859 = vadd.f32 %v827, 3.0
        %v860 = vadd.f32 %v828, 3.0
        %v861 = vadd.f32 %v829, 3.0
        %v862 = vadd.f32 %v830, 3.0
        %v863 = vmax.f32 %v831, 0.0
        %v864 = vmax.f32 %v832, 0.0
        %v865 = vmax.f32 %v833, 0.0
        %v866 = vmax.f32 %v834, 0.0
        %v867 = vmax.f32 %v835, 0.0
        %v868 = vmax.f32 %v836, 0.0
        %v869 = vmax.f32 %v837, 0.0
        %v870 = vmax.f32 %v838, 0.0
        %v871 = vmax.f32 %v839, 0.0
        %v872 = vmax.f32 %v840, 0.0
        %v873 = vmax.f32 %v841, 0.0
        %v874 = vmax.f32 %v842, 0.0
        %v875 = vmax.f32 %v843, 0.0
        %v876 = vmax.f32 %v844, 0.0
        %v877 = vmax.f32 %v845, 0.0
        %v878 = vmax.f32 %v846, 0.0
        %v879 = vmax.f32 %v847, 0.0
        %v880 = vmax.f32 %v848, 0.0
        %v881 = vmax.f32 %v849, 0.0
        %v882 = vmax.f32 %v850, 0.0
        %v883 = vmax.f32 %v851, 0.0
        %v884 = vmax.f32 %v852, 0.0
        %v885 = vmax.f32 %v853, 0.0
        %v886 = vmax.f32 %v854, 0.0
        %v887 = vmax.f32 %v855, 0.0
        %v888 = vmax.f32 %v856, 0.0
        %v889 = vmax.f32 %v857, 0.0
        %v890 = vmax.f32 %v858, 0.0
        %v891 = vmax.f32 %v859, 0.0
        %v892 = vmax.f32 %v860, 0.0
        %v893 = vmax.f32 %v861, 0.0
        %v894 = vmax.f32 %v862, 0.0
        %v895 = vmin.f32 %v863, 6.0
        %v896 = vmin.f32 %v864, 6.0
        %v897 = vmin.f32 %v865, 6.0
        %v898 = vmin.f32 %v866, 6.0
        %v899 = vmin.f32 %v867, 6.0
        %v900 = vmin.f32 %v868, 6.0
        %v901 = vmin.f32 %v869, 6.0
        %v902 = vmin.f32 %v870, 6.0
        %v903 = vmin.f32 %v871, 6.0
        %v904 = vmin.f32 %v872, 6.0
        %v905 = vmin.f32 %v873, 6.0
        %v906 = vmin.f32 %v874, 6.0
        %v907 = vmin.f32 %v875, 6.0
        %v908 = vmin.f32 %v876, 6.0
        %v909 = vmin.f32 %v877, 6.0
        %v910 = vmin.f32 %v878, 6.0
        %v911 = vmin.f32 %v879, 6.0
        %v912 = vmin.f32 %v880, 6.0
        %v913 = vmin.f32 %v881, 6.0
        %v914 = vmin.f32 %v882, 6.0
        %v915 = vmin.f32 %v883, 6.0
        %v916 = vmin.f32 %v884, 6.0
        %v917 = vmin.f32 %v885, 6.0
        %v918 = vmin.f32 %v886, 6.0
        %v919 = vmin.f32 %v887, 6.0
        %v920 = vmin.f32 %v888, 6.0
        %v921 = vmin.f32 %v889, 6.0
        %v922 = vmin.f32 %v890, 6.0
        %v923 = vmin.f32 %v891, 6.0
        %v924 = vmin.f32 %v892, 6.0
        %v925 = vmin.f32 %v893, 6.0
        %v926 = vmin.f32 %v894, 6.0
        %v927 = vmul.f32 %v799, %v895
        %v928 = vmul.f32 %v800, %v896
        %v929 = vmul.f32 %v801, %v897
        %v930 = vmul.f32 %v802, %v898
        %v931 = vmul.f32 %v803, %v899
        %v932 = vmul.f32 %v804, %v900
        %v933 = vmul.f32 %v805, %v901
        %v934 = vmul.f32 %v806, %v902
        %v935 = vmul.f32 %v807, %v903
        %v936 = vmul.f32 %v808, %v904
        %v937 = vmul.f32 %v809, %v905
        %v938 = vmul.f32 %v810, %v906
        %v939 = vmul.f32 %v811, %v907
        %v940 = vmul.f32 %v812, %v908
        %v941 = vmul.f32 %v813, %v909
        %v942 = vmul.f32 %v814, %v910
        %v943 = vmul.f32 %v815, %v911
        %v944 = vmul.f32 %v816, %v912
        %v945 = vmul.f32 %v817, %v913
        %v946 = vmul.f32 %v818, %v914
        %v947 = vmul.f32 %v819, %v915
        %v948 = vmul.f32 %v820, %v916
        %v949 = vmul.f32 %v821, %v917
        %v950 = vmul.f32 %v822, %v918
        %v951 = vmul.f32 %v823, %v919
        %v952 = vmul.f32 %v824, %v920
        %v953 = vmul.f32 %v825, %v921
        %v954 = vmul.f32 %v826, %v922
        %v955 = vmul.f32 %v827, %v923
        %v956 = vmul.f32 %v828, %v924
        %v957 = vmul.f32 %v829, %v925
        %v958 = vmul.f32 %v830, %v926
        %v959 = vmul.f32 %v927, 0.16666667
        %v960 = vmul.f32 %v928, 0.16666667
        %v961 = vmul.f32 %v929, 0.16666667
        %v962 = vmul.f32 %v930, 0.16666667
        %v963 = vmul.f32 %v931, 0.16666667
        %v964 = vmul.f32 %v932, 0.16666667
        %v965 = vmul.f32 %v933, 0.16666667
        %v966 = vmul.f32 %v934, 0.16666667
        %v967 = vmul.f32 %v935, 0.16666667
        %v968 = vmul.f32 %v936, 0.16666667
        %v969 = vmul.f32 %v937, 0.16666667
        %v970 = vmul.f32 %v938, 0.16666667
        %v971 = vmul.f32 %v939, 0.16666667
        %v972 = vmul.f32 %v940, 0.16666667
        %v973 = vmul.f32 %v941, 0.16666667
        %v974 = vmul.f32 %v942, 0.16666667
        %v975 = vmul.f32 %v943, 0.16666667
        %v976 = vmul.f32 %v944, 0.16666667
        %v977 = vmul.f32 %v945, 0.16666667
        %v978 = vmul.f32 %v946, 0.16666667
        %v979 = vmul.f32 %v947, 0.16666667
        %v980 = vmul.f32 %v948, 0.16666667
        %v981 = vmul.f32 %v949, 0.16666667
        %v982 = vmul.f32 %v950, 0.16666667
        %v983 = vmul.f32 %v951, 0.16666667
        %v984 = vmul.f32 %v952, 0.16666667
        %v985 = vmul.f32 %v953, 0.16666667
        %v986 = vmul.f32 %v954, 0.16666667
        %v987 = vmul.f32 %v955, 0.16666667
        %v988 = vmul.f32 %v956, 0.16666667
        %v989 = vmul.f32 %v957, 0.16666667
        %v990 = vmul.f32 %v958, 0.16666667
        %991 = vst [vmem:[%s163] sm:$0xff] %v959
        %992 = vst [vmem:[%s163 + $0x8] sm:$0xff] %v960
        %993 = vst [vmem:[%s163 + $0x10] sm:$0xff] %v961
        %994 = vst [vmem:[%s163 + $0x18] sm:$0xff] %v962
        %995 = vst [vmem:[%s163 + $0x20] sm:$0xff] %v963
        %996 = vst [vmem:[%s163 + $0x28] sm:$0xff] %v964
        %997 = vst [vmem:[%s163 + $0x30] sm:$0xff] %v965
        %998 = vst [vmem:[%s163 + $0x38] sm:$0xff] %v966
        %999 = vst [vmem:[%s163 + $0x40] sm:$0xff] %v967
        %1000 = vst [vmem:[%s163 + $0x48] sm:$0xff] %v968
        %1001 = vst [vmem:[%s163 + $0x50] sm:$0xff] %v969
        %1002 = vst [vmem:[%s163 + $0x58] sm:$0xff] %v970
        %1003 = vst [vmem:[%s163 + $0x60] sm:$0xff] %v971
        %1004 = vst [vmem:[%s163 + $0x68] sm:$0xff] %v972
        %1005 = vst [vmem:[%s163 + $0x70] sm:$0xff] %v973
        %1006 = vst [vmem:[%s163 + $0x78] sm:$0xff] %v974
        %1007 = vst [vmem:[%s163 + $0x80] sm:$0xff] %v975
        %1008 = vst [vmem:[%s163 + $0x88] sm:$0xff] %v976
        %1009 = vst [vmem:[%s163 + $0x90] sm:$0xff] %v977
        %1010 = vst [vmem:[%s163 + $0x98] sm:$0xff] %v978
        %1011 = vst [vmem:[%s163 + $0xa0] sm:$0xff] %v979
        %1012 = vst [vmem:[%s163 + $0xa8] sm:$0xff] %v980
        %1013 = vst [vmem:[%s163 + $0xb0] sm:$0xff] %v981
        %1014 = vst [vmem:[%s163 + $0xb8] sm:$0xff] %v982
        %1015 = vst [vmem:[%s163 + $0xc0] sm:$0xff] %v983
        %1016 = vst [vmem:[%s163 + $0xc8] sm:$0xff] %v984
        %1017 = vst [vmem:[%s163 + $0xd0] sm:$0xff] %v985
        %1018 = vst [vmem:[%s163 + $0xd8] sm:$0xff] %v986
        %1019 = vst [vmem:[%s163 + $0xe0] sm:$0xff] %v987
        %1020 = vst [vmem:[%s163 + $0xe8] sm:$0xff] %v988
        %1021 = vst [vmem:[%s163 + $0xf0] sm:$0xff] %v989
        %1022 = vst [vmem:[%s163 + $0xf8] sm:$0xff] %v990
        %s1023 = sand.u32 %s93, 1
        %s1024 = scalar_lea.sflag [#allocation3], %s1023
        %s1025 = sand.u32 %s93, 1
        %s1026 = smul.addr %s1025, 256
        %s1027 = scalar_lea.vmem [#allocation2], %s1026
        // Predicated region
        $region33: #{tpu_custom_call.1} parent=31 // pred_check
          %p1028 = pneg %p103
        $region34: #{tpu_custom_call.1} parent=31 // pred_check_branch
          %1030 = sbr.rel (%p1028) target = $region36
        $region35: #{tpu_custom_call.1} parent=31 // pred_region
          %s1032 = ssub.s32 4096, 4096
          %1033 = vsyncadd %s1024, %s1032
          %s1034 = smul.addr %s17, 32
          %s1035 = smul.addr %s1034, 128
          %s1036 = scalar_lea.hbm %s3, %s1035
          %s1037 = sshll.u32 %s1027, 4
          %s1038 = int_to_ptr.vmem [resolvable:$true] %s1037
          %1043 = dma.vmem_to_hbm [thread:$0]  %s1038, 4096, %s1036, %s1024, 128, 128, 8
        $region36: #{tpu_custom_call.1} parent=31 // pred_fallthru
          _
      $region32: #{tpu_custom_call.1} parent=5 // pred_fallthru
        _
      %p1044 = scmp.le.s32.totalorder 2, %s12
      // Predicated region
      $region37: #{tpu_custom_call.1} parent=5 // pred_check
        %p1045 = pneg %p1044
      $region38: #{tpu_custom_call.1} parent=5 // pred_check_branch
        %1047 = sbr.rel (%p1045) target = $region40
      $region39: #{tpu_custom_call.1} parent=5 // pred_region
        %s1048 = ssub.s32 %s12, 2
        // Predicated region
        $region41: #{tpu_custom_call.1} parent=39 // pred_check
          %p1049 = pneg %p109
        $region42: #{tpu_custom_call.1} parent=39 // pred_check_branch
          %1051 = sbr.rel (%p1049) target = $region44
        $region43: #{tpu_custom_call.1} parent=39 // pred_region
          %s1052 = sand.u32 %s94, 1
          %s1053 = scalar_lea.sflag [#allocation3], %s1052
          %s1054 = sand.u32 %s94, 1
          %s1055 = smul.addr %s1054, 256
          %s1056 = scalar_lea.vmem [#allocation2], %s1055
          %1057 = dma.done %s1053, 4096
        $region44: #{tpu_custom_call.1} parent=39 // pred_fallthru
          _
      $region40: #{tpu_custom_call.1} parent=5 // pred_fallthru
        _
    $region6: #{tpu_custom_call.1} parent=1 // loop_footer
      %s16 = sadd.s32 1, %s12
    $region7: #{tpu_custom_call.1} parent=1 // loop_footer_branch
      %11 = sbr.rel target = $region3
    $region8: #{tpu_custom_call.1} parent=1 // loop_exit
      _
    %1058 = vsyncpa [#allocation3], 1
    %s1059 = scalar_lea.sflag [#allocation3], 1
    %1060 = vsyncpa %s1059, 1

</llo_original>
